<compile_context>
chip_gen: v7x
topology: tpu7x:2x2x1
jax: 0.10.0
libtpu: 0.0.40
codegen_flags: <defaults>
</compile_context>

<pallas_src>
import functools
import math

import jax
import jax.numpy as jnp
from jax.experimental import pallas as pl
from jax.experimental.pallas import tpu as pltpu

LANE = 128       # feature padding (lane width)
SUBLANE = 8      # batch padding granularity (sublane width)
BIG_TILE = 512   # cap on the batch tile (amortizes grid-step overhead)


def _round_up(x, m):
    return (x + m - 1) // m * m


# ----------------------------------------------------------------------------
# Pallas kernel: whole MLP fused, activations stay on-chip
# ----------------------------------------------------------------------------
def _fused_mlp_kernel(x_ref, w_ref, b_ref, alpha_ref, o_ref, *, n_sub,
                      use_max_prelu):
    # x_ref:     (TB, 128)      bf16  activation tile for this batch block
    # w_ref:     (L, 128, 128)  bf16  all layer weights (in, out), VMEM-resident
    # b_ref:     (L, 1, 128)    f32   all layer biases, VMEM-resident
    # alpha_ref: (L,)           f32   PReLU alphas in SMEM (last entry unused)
    # o_ref:     (TB, 128)      f32   padded policy output tile
    num_layers = w_ref.shape[0]
    tb = x_ref.shape[0]
    rows = tb // n_sub

    # n_sub independent sub-tiles -> independent dependency chains -> ILP
    # between MXU (next matmul) and VPU (bias/PReLU/cast epilogue).
    hs = [x_ref[pl.ds(s * rows, rows), :] for s in range(n_sub)]

    for l in range(num_layers):                       # static unroll, L is small
        is_last = l == num_layers - 1
        w = w_ref[l]                                  # same RHS for all sub-tiles
        b = b_ref[l]
        ys = [jnp.dot(h, w, preferred_element_type=jnp.float32) + b  # bf16 MXU, f32 acc
              for h in hs]
        if not is_last:                               # final layer: plain linear
            a = alpha_ref[l]
            if use_max_prelu:                         # valid iff 0 <= alpha <= 1
                ys = [jnp.maximum(y, a * y) for y in ys]
            else:
                ys = [jnp.where(y >= 0.0, y, a * y) for y in ys]
            hs = [y.astype(w_ref.dtype) for y in ys]  # bf16 for next MXU op
        else:
            hs = ys                                   # keep f32 for the output

    for s in range(n_sub):
        o_ref[pl.ds(s * rows, rows), :] = hs[s]


# ----------------------------------------------------------------------------
# Wrapper
# ----------------------------------------------------------------------------
def _choose_batch_tile(batch):
    """Batch tile: >=2 grid steps whenever possible (v7x megacore), capped
    at BIG_TILE; tiny batches just round up to one sublane-aligned tile."""
    if batch <= SUBLANE:
        return SUBLANE
    half = _round_up((batch + 1) // 2, SUBLANE)
    return min(BIG_TILE, half)


def fused_mlp_forward(packed, x):
    """x: (batch, number_of_inputs) f32  ->  (batch, action_size) f32."""
    W, B, A = packed["W"], packed["b"], packed["alpha"]
    n_in, n_out = packed["n_in"], packed["n_out"]
    num_layers = W.shape[0]

    batch = x.shape[0]
    tb = _choose_batch_tile(batch)
    b_pad = _round_up(batch, tb)
    grid = b_pad // tb
    # Split the tile into two sublane-aligned halves when it is big enough.
    n_sub = 2 if (tb >= 2 * SUBLANE and tb % (2 * SUBLANE) == 0) else 1

    # bf16 input stream: the kernel feeds bf16 to the MXU anyway, so this
    # halves activation HBM bytes with no numeric change vs. the reference.
    xp = jnp.zeros((b_pad, LANE), jnp.bfloat16)
    xp = xp.at[:batch, :n_in].set(x.astype(jnp.bfloat16))

    kernel = functools.partial(_fused_mlp_kernel, n_sub=n_sub,
                               use_max_prelu=packed["alpha_in_unit"])

    out = pl.pallas_call(
        kernel,
        out_shape=jax.ShapeDtypeStruct((b_pad, LANE), jnp.float32),
        grid=(grid,),
        in_specs=[
            pl.BlockSpec((tb, LANE), lambda i: (i, 0)),                  # x tile
            pl.BlockSpec((num_layers, LANE, LANE), lambda i: (0, 0, 0)), # weights (resident)
            pl.BlockSpec((num_layers, 1, LANE), lambda i: (0, 0, 0)),    # biases (resident)
            pl.BlockSpec(memory_space=pltpu.MemorySpace.SMEM),           # alphas
        ],
        out_specs=pl.BlockSpec((tb, LANE), lambda i: (i, 0)),
        compiler_params=pltpu.CompilerParams(
            dimension_semantics=("parallel",),
            # Resident VMEM footprint (<1 MiB at TB=512) is far under the
            # scoped default on v5e/v6e/v7x: no vmem_limit_bytes override.
        ),
    )(xp, W, B, A)
    return out[:batch, :n_out]


# ----------------------------------------------------------------------------
# Parameter construction (PyTorch-style uniform init), padding done ONCE here
# ----------------------------------------------------------------------------
def init_linear(key, fan_in, fan_out):
    kw, kb = jax.random.split(key)
    bound = 1.0 / math.sqrt(fan_in)
    # weight stored as (in, out) == transpose of PyTorch's (out, in)
    w = jax.random.uniform(kw, (fan_in, fan_out), jnp.float32, -bound, bound)
    b = jax.random.uniform(kb, (fan_out,), jnp.float32, -bound, bound)
    return w, b


def build_raw_params(key, number_of_inputs, num_hidden, num_blocks, action_size):
    """List of (w (in,out), b (out,), alpha | None) matching the module layout."""
    keys = jax.random.split(key, num_blocks + 3)
    layers = [init_linear(keys[0], number_of_inputs, num_hidden) + (0.25,)]      # startBlock
    for i in range(num_blocks):                                                  # backBone
        layers.append(init_linear(keys[1 + i], num_hidden, num_hidden) + (0.25,))
    half = num_hidden // 2
    layers.append(init_linear(keys[num_blocks + 1], num_hidden, half) + (0.25,)) # policyHead[0:2]
    layers.append(init_linear(keys[num_blocks + 2], half, action_size) + (None,))# policyHead[2]
    # NOTE: PReLU alphas are the PyTorch default (0.25); pass trained values
    # (static Python floats) here if available.
    return layers


def pack_params(layers, matmul_dtype=jnp.bfloat16):
    """Pad / transpose / cast once; stack into lane-dense kernel inputs."""
    L = len(layers)
    for (w, _, _) in layers:
        assert w.shape[0] <= LANE and w.shape[1] <= LANE, (
            "fused kernel assumes every feature dim <= 128; larger dims would "
            "need K/N tiling which this kernel does not implement")
    W = jnp.zeros((L, LANE, LANE), matmul_dtype)
    B = jnp.zeros((L, 1, LANE), jnp.float32)
    A = jnp.ones((L,), jnp.float32)
    alpha_in_unit = True
    for l, (w, b, a) in enumerate(layers):
        fi, fo = w.shape
        W = W.at[l, :fi, :fo].set(w.astype(matmul_dtype))
        B = B.at[l, 0, :fo].set(b.astype(jnp.float32))
        if a is not None:
            A = A.at[l].set(jnp.float32(a))
            alpha_in_unit = alpha_in_unit and (0.0 <= float(a) <= 1.0)
    return {"W": W, "b": B, "alpha": A, "alpha_in_unit": alpha_in_unit,
            "n_in": layers[0][0].shape[0], "n_out": layers[-1][0].shape[1]}


# ----------------------------------------------------------------------------
# Pure-JAX reference mirroring the kernel math (bf16 MXU operands, f32 accum)
# ----------------------------------------------------------------------------
def reference_forward(layers, x, matmul_dtype=jnp.bfloat16):
    h = x.astype(jnp.float32)
    for (w, b, a) in layers:
        y = jnp.dot(h.astype(matmul_dtype), w.astype(matmul_dtype),
                    preferred_element_type=jnp.float32) + b
        if a is not None:
            y = jnp.where(y >= 0.0, y, a * y)
        h = y
    return h


if __name__ == "__main__":
    # Small shapes consistent with the module's forward:
    batch = 2
    number_of_inputs = 16
    num_hidden = 32
    num_blocks = 2
    action_size = 8

    key = jax.random.PRNGKey(0)
    kp, kx, kx2 = jax.random.split(key, 3)
    layers = build_raw_params(kp, number_of_inputs, num_hidden, num_blocks, action_size)
    packed = pack_params(layers)

    # 1) tiny-batch path: grid=1, single in-kernel chain
    x = jax.random.normal(kx, (batch, number_of_inputs), jnp.float32)
    policy = jax.block_until_ready(fused_mlp_forward(packed, x))
    ref = reference_forward(layers, x)
    assert policy.shape == (batch, action_size)
    assert jnp.allclose(policy, ref, atol=1e-2, rtol=1e-2), "mismatch vs reference (batch=2)"

    # 2) larger-batch path: grid=2 (megacore split) and two in-kernel sub-tiles
    batch2 = 64
    x2 = jax.random.normal(kx2, (batch2, number_of_inputs), jnp.float32)
    policy2 = jax.block_until_ready(fused_mlp_forward(packed, x2))
    ref2 = reference_forward(layers, x2)
    assert policy2.shape == (batch2, action_size)
    assert jnp.allclose(policy2, ref2, atol=1e-2, rtol=1e-2), "mismatch vs reference (batch=64)"

    print("KERNEL_OK")
</pallas_src>

<mosaic_0001>
module attributes {stable_mosaic.version = 11 : i64} {
  func.func @_fused_mlp_kernel(%arg0: i32, %arg1: memref<8x128xbf16, #tpu.memory_space<vmem>>, %arg2: memref<5x128x128xbf16, #tpu.memory_space<vmem>>, %arg3: memref<5x1x128xf32, #tpu.memory_space<vmem>>, %arg4: memref<5xf32, #tpu.memory_space<smem>>, %arg5: memref<8x128xf32, #tpu.memory_space<vmem>>) attributes {dimension_semantics = [#tpu.dimension_semantics<parallel>], iteration_bounds = array<i64: 1>, scalar_prefetch = 0 : i64, scratch_operands = 0 : i64, tpu.core_type = #tpu.core_type<tc>, window_params = [{transform_indices = @transform_0, window_bounds = array<i64: 8, 128>}, {pipeline_mode = #tpu.pipeline_mode<synchronous>, transform_indices = @transform_1, window_bounds = array<i64: 5, 128, 128>}, {pipeline_mode = #tpu.pipeline_mode<synchronous>, transform_indices = @transform_2, window_bounds = array<i64: 5, 1, 128>}, {transform_indices = @transform_3, window_bounds = array<i64: 5>}, {transform_indices = @transform_4, window_bounds = array<i64: 8, 128>}]} {
    %c0 = arith.constant 0 : index
    %c0_0 = arith.constant 0 : index
    %0 = vector.load %arg1[%c0, %c0_0] : memref<8x128xbf16, #tpu.memory_space<vmem>>, vector<8x128xbf16>
    %c0_1 = arith.constant 0 : index
    %c0_2 = arith.constant 0 : index
    %c0_3 = arith.constant 0 : index
    %1 = vector.load %arg2[%c0_1, %c0_2, %c0_3] : memref<5x128x128xbf16, #tpu.memory_space<vmem>>, vector<1x128x128xbf16>
    %2 = vector.shape_cast %1 : vector<1x128x128xbf16> to vector<128x128xbf16>
    %c0_4 = arith.constant 0 : index
    %c0_5 = arith.constant 0 : index
    %c0_6 = arith.constant 0 : index
    %3 = vector.load %arg3[%c0_4, %c0_5, %c0_6] : memref<5x1x128xf32, #tpu.memory_space<vmem>>, vector<1x1x128xf32>
    %4 = vector.shape_cast %3 : vector<1x1x128xf32> to vector<1x128xf32>
    %cst = arith.constant dense<0.000000e+00> : vector<8x128xf32>
    %5 = tpu.matmul %0, %2, %cst {dimension_numbers = #tpu.dot_dimension_numbers<[1], [0], [0], [1], [0, 0, 1, 1], [], []>} : vector<8x128xbf16>, vector<128x128xbf16>, vector<8x128xf32> -> vector<8x128xf32>
    %6 = vector.broadcast %4 : vector<1x128xf32> to vector<8x128xf32>
    %7 = arith.addf %5, %6 : vector<8x128xf32>
    %c0_7 = arith.constant 0 : index
    %8 = memref.load %arg4[%c0_7] : memref<5xf32, #tpu.memory_space<smem>>
    %9 = vector.broadcast %8 : f32 to vector<8x128xf32>
    %10 = arith.mulf %9, %7 : vector<8x128xf32>
    %11 = arith.maximumf %7, %10 : vector<8x128xf32>
    %12 = arith.truncf %11 : vector<8x128xf32> to vector<8x128xbf16>
    %c1 = arith.constant 1 : index
    %c0_8 = arith.constant 0 : index
    %c0_9 = arith.constant 0 : index
    %13 = vector.load %arg2[%c1, %c0_8, %c0_9] : memref<5x128x128xbf16, #tpu.memory_space<vmem>>, vector<1x128x128xbf16>
    %14 = vector.shape_cast %13 : vector<1x128x128xbf16> to vector<128x128xbf16>
    %c1_10 = arith.constant 1 : index
    %c0_11 = arith.constant 0 : index
    %c0_12 = arith.constant 0 : index
    %15 = vector.load %arg3[%c1_10, %c0_11, %c0_12] : memref<5x1x128xf32, #tpu.memory_space<vmem>>, vector<1x1x128xf32>
    %16 = vector.shape_cast %15 : vector<1x1x128xf32> to vector<1x128xf32>
    %cst_13 = arith.constant dense<0.000000e+00> : vector<8x128xf32>
    %17 = tpu.matmul %12, %14, %cst_13 {dimension_numbers = #tpu.dot_dimension_numbers<[1], [0], [0], [1], [0, 0, 1, 1], [], []>} : vector<8x128xbf16>, vector<128x128xbf16>, vector<8x128xf32> -> vector<8x128xf32>
    %18 = vector.broadcast %16 : vector<1x128xf32> to vector<8x128xf32>
    %19 = arith.addf %17, %18 : vector<8x128xf32>
    %c1_14 = arith.constant 1 : index
    %20 = memref.load %arg4[%c1_14] : memref<5xf32, #tpu.memory_space<smem>>
    %21 = vector.broadcast %20 : f32 to vector<8x128xf32>
    %22 = arith.mulf %21, %19 : vector<8x128xf32>
    %23 = arith.maximumf %19, %22 : vector<8x128xf32>
    %24 = arith.truncf %23 : vector<8x128xf32> to vector<8x128xbf16>
    %c2 = arith.constant 2 : index
    %c0_15 = arith.constant 0 : index
    %c0_16 = arith.constant 0 : index
    %25 = vector.load %arg2[%c2, %c0_15, %c0_16] : memref<5x128x128xbf16, #tpu.memory_space<vmem>>, vector<1x128x128xbf16>
    %26 = vector.shape_cast %25 : vector<1x128x128xbf16> to vector<128x128xbf16>
    %c2_17 = arith.constant 2 : index
    %c0_18 = arith.constant 0 : index
    %c0_19 = arith.constant 0 : index
    %27 = vector.load %arg3[%c2_17, %c0_18, %c0_19] : memref<5x1x128xf32, #tpu.memory_space<vmem>>, vector<1x1x128xf32>
    %28 = vector.shape_cast %27 : vector<1x1x128xf32> to vector<1x128xf32>
    %cst_20 = arith.constant dense<0.000000e+00> : vector<8x128xf32>
    %29 = tpu.matmul %24, %26, %cst_20 {dimension_numbers = #tpu.dot_dimension_numbers<[1], [0], [0], [1], [0, 0, 1, 1], [], []>} : vector<8x128xbf16>, vector<128x128xbf16>, vector<8x128xf32> -> vector<8x128xf32>
    %30 = vector.broadcast %28 : vector<1x128xf32> to vector<8x128xf32>
    %31 = arith.addf %29, %30 : vector<8x128xf32>
    %c2_21 = arith.constant 2 : index
    %32 = memref.load %arg4[%c2_21] : memref<5xf32, #tpu.memory_space<smem>>
    %33 = vector.broadcast %32 : f32 to vector<8x128xf32>
    %34 = arith.mulf %33, %31 : vector<8x128xf32>
    %35 = arith.maximumf %31, %34 : vector<8x128xf32>
    %36 = arith.truncf %35 : vector<8x128xf32> to vector<8x128xbf16>
    %c3 = arith.constant 3 : index
    %c0_22 = arith.constant 0 : index
    %c0_23 = arith.constant 0 : index
    %37 = vector.load %arg2[%c3, %c0_22, %c0_23] : memref<5x128x128xbf16, #tpu.memory_space<vmem>>, vector<1x128x128xbf16>
    %38 = vector.shape_cast %37 : vector<1x128x128xbf16> to vector<128x128xbf16>
    %c3_24 = arith.constant 3 : index
    %c0_25 = arith.constant 0 : index
    %c0_26 = arith.constant 0 : index
    %39 = vector.load %arg3[%c3_24, %c0_25, %c0_26] : memref<5x1x128xf32, #tpu.memory_space<vmem>>, vector<1x1x128xf32>
    %40 = vector.shape_cast %39 : vector<1x1x128xf32> to vector<1x128xf32>
    %cst_27 = arith.constant dense<0.000000e+00> : vector<8x128xf32>
    %41 = tpu.matmul %36, %38, %cst_27 {dimension_numbers = #tpu.dot_dimension_numbers<[1], [0], [0], [1], [0, 0, 1, 1], [], []>} : vector<8x128xbf16>, vector<128x128xbf16>, vector<8x128xf32> -> vector<8x128xf32>
    %42 = vector.broadcast %40 : vector<1x128xf32> to vector<8x128xf32>
    %43 = arith.addf %41, %42 : vector<8x128xf32>
    %c3_28 = arith.constant 3 : index
    %44 = memref.load %arg4[%c3_28] : memref<5xf32, #tpu.memory_space<smem>>
    %45 = vector.broadcast %44 : f32 to vector<8x128xf32>
    %46 = arith.mulf %45, %43 : vector<8x128xf32>
    %47 = arith.maximumf %43, %46 : vector<8x128xf32>
    %48 = arith.truncf %47 : vector<8x128xf32> to vector<8x128xbf16>
    %c4 = arith.constant 4 : index
    %c0_29 = arith.constant 0 : index
    %c0_30 = arith.constant 0 : index
    %49 = vector.load %arg2[%c4, %c0_29, %c0_30] : memref<5x128x128xbf16, #tpu.memory_space<vmem>>, vector<1x128x128xbf16>
    %50 = vector.shape_cast %49 : vector<1x128x128xbf16> to vector<128x128xbf16>
    %c4_31 = arith.constant 4 : index
    %c0_32 = arith.constant 0 : index
    %c0_33 = arith.constant 0 : index
    %51 = vector.load %arg3[%c4_31, %c0_32, %c0_33] : memref<5x1x128xf32, #tpu.memory_space<vmem>>, vector<1x1x128xf32>
    %52 = vector.shape_cast %51 : vector<1x1x128xf32> to vector<1x128xf32>
    %cst_34 = arith.constant dense<0.000000e+00> : vector<8x128xf32>
    %53 = tpu.matmul %48, %50, %cst_34 {dimension_numbers = #tpu.dot_dimension_numbers<[1], [0], [0], [1], [0, 0, 1, 1], [], []>} : vector<8x128xbf16>, vector<128x128xbf16>, vector<8x128xf32> -> vector<8x128xf32>
    %54 = vector.broadcast %52 : vector<1x128xf32> to vector<8x128xf32>
    %55 = arith.addf %53, %54 : vector<8x128xf32>
    %c0_35 = arith.constant 0 : index
    %c0_36 = arith.constant 0 : index
    %56 = vector.load %arg5[%c0_35, %c0_36] : memref<8x128xf32, #tpu.memory_space<vmem>>, vector<8x128xf32>
    tpu.vector_store %arg5[%c0_35, %c0_36], %55 {strides = array<i32>} : memref<8x128xf32, #tpu.memory_space<vmem>>, vector<8x128xf32>,
    return
  }
  func.func @transform_0(%arg0: i32) -> (i32, i32) {
    %c0_i32 = arith.constant 0 : i32
    %c0_i32_0 = arith.constant 0 : i32
    return %arg0, %c0_i32 : i32, i32
  }
  func.func @transform_1(%arg0: i32) -> (i32, i32, i32) {
    %c0_i32 = arith.constant 0 : i32
    %c0_i32_0 = arith.constant 0 : i32
    %c0_i32_1 = arith.constant 0 : i32
    %c0_i32_2 = arith.constant 0 : i32
    return %c0_i32, %c0_i32_0, %c0_i32_1 : i32, i32, i32
  }
  func.func @transform_2(%arg0: i32) -> (i32, i32, i32) {
    %c0_i32 = arith.constant 0 : i32
    %c0_i32_0 = arith.constant 0 : i32
    %c0_i32_1 = arith.constant 0 : i32
    %c0_i32_2 = arith.constant 0 : i32
    return %c0_i32, %c0_i32_0, %c0_i32_1 : i32, i32, i32
  }
  func.func @transform_3(%arg0: i32) -> i32 {
    %c0_i32 = arith.constant 0 : i32
    %c0_i32_0 = arith.constant 0 : i32
    return %c0_i32 : i32
  }
  func.func @transform_4(%arg0: i32) -> (i32, i32) {
    %c0_i32 = arith.constant 0 : i32
    %c0_i32_0 = arith.constant 0 : i32
    return %arg0, %c0_i32 : i32, i32
  }
}

</mosaic_0001>

<llo_original>
// kernel: tpu_custom_call.1
$region0: #{tpu_custom_call.1}
  #allocation0 [shape = 'u32[]', space=smem, size = 0x4, offset = 0x4, fixed_abs, tag = 'smem constant byte address 0x4 - core index']
  #allocation1 [shape = 'u32[144,128]{1,0:T(1,128)}', space=vmem, size = 0x12000, scoped, tag = 'internal scratch']
  %s0 = inlined_call_operand.hbm [shape: bf16[8,128], index: 0, kind: input, shape index: {}]
  %s1 = inlined_call_operand.hbm [shape: bf16[5,128,128], index: 1, kind: input, shape index: {}]
  %s2 = inlined_call_operand.vmem [shape: f32[5,1,128], index: 2, kind: input, shape index: {}]
  %s3 = inlined_call_operand.vmem [shape: f32[5], index: 3, kind: input, shape index: {}]
  %s4 = inlined_call_operand.hbm [shape: f32[8,128], index: 4, kind: output, shape index: {}]
  %s5 = sld [smem:[#allocation0]]
  $region38: #{tpu_custom_call.1} parent=0
    _
  %s7 = ssub.s32 1, %s5
  %s8 = scalar_select 0, %s7, %s5
  $region1: #{tpu_custom_call.1} parent=0
    #allocation2 [shape = 'u8[2048]{0}', space=vmem, size = 0x800, scoped, tag = 'input window, operand 0, single buffered']
    #allocation3 [shape = 's32[1]{0}', space=sflag, size = 0x4, scoped, tag = 'scoped memory for tpu_custom_call.1']
    #allocation4 [shape = 's32[1]{0}', space=sflag, size = 0x4, scoped, tag = 'scoped memory for tpu_custom_call.1']
    #allocation5 [shape = 's32[1]{0}', space=sflag, size = 0x4, scoped, tag = 'scoped memory for tpu_custom_call.1']
    #allocation6 [shape = 'u8[163840]{0}', space=vmem, size = 0x28000, scoped, tag = 'input window, operand 1, single buffered']
    #allocation7 [shape = 's32[1]{0}', space=sflag, size = 0x4, scoped, tag = 'scoped memory for tpu_custom_call.1']
    #allocation8 [shape = 'u8[512]{0}', space=smem, size = 0x200, scoped, tag = 'input window, operand 3, single buffered']
    #allocation9 [shape = 'u8[4096]{0}', space=vmem, size = 0x1000, scoped, tag = 'output window, operand 0, single buffered']
    %9 = vsyncpa [#allocation3], 0
    %10 = vsyncpa [#allocation7], 0
    %11 = vsyncpa [#allocation5], 0
    %12 = vsyncpa [#allocation4], 0
    // Predicated region
    $region2: #{tpu_custom_call.1} parent=1 // pred_check
      _
    $region3: #{tpu_custom_call.1} parent=1 // pred_check_branch
      %14 = sbr.rel (0) target = $region5
    $region4: #{tpu_custom_call.1} parent=1 // pred_region
      %s16 = ssub.s32 64, 64
      %17 = vsyncadd [#allocation3], %s16
      %s19 = sshll.u32 [#allocation2], 4
      %s20 = int_to_ptr.vmem [resolvable:$true] %s19
      %22 = dma.hbm_to_vmem [thread:$0]  %s0, 64, %s20, [#allocation3]
    $region5: #{tpu_custom_call.1} parent=1 // pred_fallthru
      _
    // Predicated region
    $region6: #{tpu_custom_call.1} parent=1 // pred_check
      _
    $region7: #{tpu_custom_call.1} parent=1 // pred_check_branch
      %24 = sbr.rel (0) target = $region9
    $region8: #{tpu_custom_call.1} parent=1 // pred_region
      %s26 = ssub.s32 5120, 5120
      %27 = vsyncadd [#allocation7], %s26
      %s28 = sshll.u32 [#allocation6], 4
      %s29 = int_to_ptr.vmem [resolvable:$true] %s28
      %34 = dma.hbm_to_vmem [thread:$0]  %s1, 5120, %s29, [#allocation7], 64, 64, 4
    $region9: #{tpu_custom_call.1} parent=1 // pred_fallthru
      _
    // Predicated region
    $region10: #{tpu_custom_call.1} parent=1 // pred_check
      _
    $region11: #{tpu_custom_call.1} parent=1 // pred_check_branch
      %36 = sbr.rel (0) target = $region13
    $region12: #{tpu_custom_call.1} parent=1 // pred_region
      _
    $region13: #{tpu_custom_call.1} parent=1 // pred_fallthru
      _
    // Predicated region
    $region14: #{tpu_custom_call.1} parent=1 // pred_check
      _
    $region15: #{tpu_custom_call.1} parent=1 // pred_check_branch
      %38 = sbr.rel (0) target = $region17
    $region16: #{tpu_custom_call.1} parent=1 // pred_region
      %s40 = ssub.s32 16, 16
      %41 = vsyncadd [#allocation5], %s40
      %s43 = sshll.u32 %s3, 4
      %s44 = int_to_ptr.vmem [resolvable:$true] %s43
      %46 = dma.vmem_to_smem %s44, 16, [#allocation8], [#allocation5]
    $region17: #{tpu_custom_call.1} parent=1 // pred_fallthru
      _
    // Predicated region
    $region18: #{tpu_custom_call.1} parent=1 // pred_check
      _
    $region19: #{tpu_custom_call.1} parent=1 // pred_check_branch
      %48 = sbr.rel (0) target = $region21
    $region20: #{tpu_custom_call.1} parent=1 // pred_region
      %49 = dma.done [#allocation3], 64
    $region21: #{tpu_custom_call.1} parent=1 // pred_fallthru
      _
    // Predicated region
    $region22: #{tpu_custom_call.1} parent=1 // pred_check
      _
    $region23: #{tpu_custom_call.1} parent=1 // pred_check_branch
      %51 = sbr.rel (0) target = $region25
    $region24: #{tpu_custom_call.1} parent=1 // pred_region
      %52 = dma.done [#allocation7], 5120
    $region25: #{tpu_custom_call.1} parent=1 // pred_fallthru
      _
    // Predicated region
    $region26: #{tpu_custom_call.1} parent=1 // pred_check
      _
    $region27: #{tpu_custom_call.1} parent=1 // pred_check_branch
      %54 = sbr.rel (0) target = $region29
    $region28: #{tpu_custom_call.1} parent=1 // pred_region
      %55 = dma.done [#allocation5], 16
    $region29: #{tpu_custom_call.1} parent=1 // pred_fallthru
      _
    %56 = sfence
    %v58 = vld [vmem:[#allocation2] sm:$0xf]
    %v59 = vld [vmem:[#allocation6] sm:$0xf]
    %v60 = vld [vmem:[#allocation6 + $0x4] sm:$0xf]
    %v61 = vld [vmem:[#allocation6 + $0x8] sm:$0xf]
    %v62 = vld [vmem:[#allocation6 + $0xc] sm:$0xf]
    %v63 = vld [vmem:[#allocation6 + $0x10] sm:$0xf]
    %v64 = vld [vmem:[#allocation6 + $0x14] sm:$0xf]
    %v65 = vld [vmem:[#allocation6 + $0x18] sm:$0xf]
    %v66 = vld [vmem:[#allocation6 + $0x1c] sm:$0xf]
    %v67 = vld [vmem:[#allocation6 + $0x20] sm:$0xf]
    %v68 = vld [vmem:[#allocation6 + $0x24] sm:$0xf]
    %v69 = vld [vmem:[#allocation6 + $0x28] sm:$0xf]
    %v70 = vld [vmem:[#allocation6 + $0x2c] sm:$0xf]
    %v71 = vld [vmem:[#allocation6 + $0x30] sm:$0xf]
    %v72 = vld [vmem:[#allocation6 + $0x34] sm:$0xf]
    %v73 = vld [vmem:[#allocation6 + $0x38] sm:$0xf]
    %v74 = vld [vmem:[#allocation6 + $0x3c] sm:$0xf]
    %v75 = vld [vmem:[%s2] sm:$0x1]
    %v77 = vlaneseq
    %v78 = vshrl.u32 %v77, 7
    %v79 = vsub.s32 0, %v78
    %v80 = vrot.slane %v75, %v79
    %v98 = vunpack.c.l.b16 %v59
    %v99 = vunpack.c.l.b16 %v60
    %v100 = vunpack.c.l.b16 %v61
    %v101 = vunpack.c.l.b16 %v62
    %v102 = vunpack.c.l.b16 %v63
    %v103 = vunpack.c.l.b16 %v64
    %v104 = vunpack.c.l.b16 %v65
    %v105 = vunpack.c.l.b16 %v66
    %v106 = vunpack.c.l.b16 %v67
    %v107 = vunpack.c.l.b16 %v68
    %v108 = vunpack.c.l.b16 %v69
    %v109 = vunpack.c.l.b16 %v70
    %v110 = vunpack.c.l.b16 %v71
    %v111 = vunpack.c.l.b16 %v72
    %v112 = vunpack.c.l.b16 %v73
    %v113 = vunpack.c.l.b16 %v74
    %v114 = vpack.c.b16 %v99, %v98
    %v115 = vpack.c.b16 %v101, %v100
    %v116 = vpack.c.b16 %v103, %v102
    %v117 = vpack.c.b16 %v105, %v104
    %v118 = vpack.c.b16 %v107, %v106
    %v119 = vpack.c.b16 %v109, %v108
    %v120 = vpack.c.b16 %v111, %v110
    %v121 = vpack.c.b16 %v113, %v112
    %130 = vmatprep.subr.bf16.mxu0 0
    %131 = vmatpush1.bf16.msra.mxu0 %v114
    %132 = vmatprep.subr.bf16.mxu0 0
    %133 = vmatpush1.bf16.msra.mxu0 %v115
    %134 = vmatprep.subr.bf16.mxu0 0
    %135 = vmatpush1.bf16.msra.mxu0 %v116
    %136 = vmatprep.subr.bf16.mxu0 0
    %137 = vmatpush1.bf16.msra.mxu0 %v117
    %138 = vmatprep.subr.bf16.mxu0 0
    %139 = vmatpush1.bf16.msra.mxu0 %v118
    %140 = vmatprep.subr.bf16.mxu0 0
    %141 = vmatpush1.bf16.msra.mxu0 %v119
    %142 = vmatprep.subr.bf16.mxu0 0
    %143 = vmatpush1.bf16.msra.mxu0 %v120
    %144 = vmatprep.subr.bf16.mxu0 0
    %145 = vmatpush1.bf16.msra.mxu0 %v121
    %146 = vmatprep.subr.bf16.mxu0 0
    %147 = vmatpush1.bf16.msra.mxu0 0
    %148 = vmatprep.subr.bf16.mxu0 0
    %149 = vmatpush1.bf16.msra.mxu0 0
    %150 = vmatprep.subr.bf16.mxu0 0
    %151 = vmatpush1.bf16.msra.mxu0 0
    %152 = vmatprep.subr.bf16.mxu0 0
    %153 = vmatpush1.bf16.msra.mxu0 0
    %154 = vmatprep.subr.bf16.mxu0 0
    %155 = vmatpush1.bf16.msra.mxu0 0
    %156 = vmatprep.subr.bf16.mxu0 0
    %157 = vmatpush1.bf16.msra.mxu0 0
    %158 = vmatprep.subr.bf16.mxu0 0
    %159 = vmatpush1.bf16.msra.mxu0 0
    %160 = vmatprep.subr.bf16.mxu0 0
    %161 = vmatpush1.bf16.msra.mxu0 0
    %162 = vmatprep.mubr.bf16.mxu0 0
    %163 = vmatmul.mubr.bf16.gmra.mrb[0].mxu0 %v58
    %v164 = vpop.f32.mrb[0].mxu0
    %v165 = vadd.f32 %v80, %v164
    %v166 = vpop.f32.mrb[0].mxu0
    %v167 = vpop.f32.mrb[0].mxu0
    %v168 = vpop.f32.mrb[0].mxu0
    %169 = vdwg.mxu0
    %s170 = sld [smem:[#allocation8]]
    %v171 = vstv %s170
    %v172 = vmul.f32 %v171, %v165
    %v173 = vmax.f32 %v165, %v172
    %v174 = vpack.c.bf16 %v173, %v173
    %s175 = scalar_lea.vmem [#allocation6], 64
    %v176 = vld [vmem:[%s175] sm:$0xf]
    %v177 = vld [vmem:[%s175 + $0x4] sm:$0xf]
    %v178 = vld [vmem:[%s175 + $0x8] sm:$0xf]
    %v179 = vld [vmem:[%s175 + $0xc] sm:$0xf]
    %v180 = vld [vmem:[%s175 + $0x10] sm:$0xf]
    %v181 = vld [vmem:[%s175 + $0x14] sm:$0xf]
    %v182 = vld [vmem:[%s175 + $0x18] sm:$0xf]
    %v183 = vld [vmem:[%s175 + $0x1c] sm:$0xf]
    %v184 = vld [vmem:[%s175 + $0x20] sm:$0xf]
    %v185 = vld [vmem:[%s175 + $0x24] sm:$0xf]
    %v186 = vld [vmem:[%s175 + $0x28] sm:$0xf]
    %v187 = vld [vmem:[%s175 + $0x2c] sm:$0xf]
    %v188 = vld [vmem:[%s175 + $0x30] sm:$0xf]
    %v189 = vld [vmem:[%s175 + $0x34] sm:$0xf]
    %v190 = vld [vmem:[%s175 + $0x38] sm:$0xf]
    %v191 = vld [vmem:[%s175 + $0x3c] sm:$0xf]
    %s192 = scalar_lea.vmem %s2, 1
    %v193 = vld [vmem:[%s192] sm:$0x1]
    %v195 = vlaneseq
    %v196 = vshrl.u32 %v195, 7
    %v197 = vsub.s32 0, %v196
    %v198 = vrot.slane %v193, %v197
    %v216 = vunpack.c.l.b16 %v176
    %v217 = vunpack.c.l.b16 %v177
    %v218 = vunpack.c.l.b16 %v178
    %v219 = vunpack.c.l.b16 %v179
    %v220 = vunpack.c.l.b16 %v180
    %v221 = vunpack.c.l.b16 %v181
    %v222 = vunpack.c.l.b16 %v182
    %v223 = vunpack.c.l.b16 %v183
    %v224 = vunpack.c.l.b16 %v184
    %v225 = vunpack.c.l.b16 %v185
    %v226 = vunpack.c.l.b16 %v186
    %v227 = vunpack.c.l.b16 %v187
    %v228 = vunpack.c.l.b16 %v188
    %v229 = vunpack.c.l.b16 %v189
    %v230 = vunpack.c.l.b16 %v190
    %v231 = vunpack.c.l.b16 %v191
    %v232 = vpack.c.b16 %v217, %v216
    %v233 = vpack.c.b16 %v219, %v218
    %v234 = vpack.c.b16 %v221, %v220
    %v235 = vpack.c.b16 %v223, %v222
    %v236 = vpack.c.b16 %v225, %v224
    %v237 = vpack.c.b16 %v227, %v226
    %v238 = vpack.c.b16 %v229, %v228
    %v239 = vpack.c.b16 %v231, %v230
    %248 = vmatprep.subr.bf16.mxu0 0
    %249 = vmatpush1.bf16.msra.mxu0 %v232
    %250 = vmatprep.subr.bf16.mxu0 0
    %251 = vmatpush1.bf16.msra.mxu0 %v233
    %252 = vmatprep.subr.bf16.mxu0 0
    %253 = vmatpush1.bf16.msra.mxu0 %v234
    %254 = vmatprep.subr.bf16.mxu0 0
    %255 = vmatpush1.bf16.msra.mxu0 %v235
    %256 = vmatprep.subr.bf16.mxu0 0
    %257 = vmatpush1.bf16.msra.mxu0 %v236
    %258 = vmatprep.subr.bf16.mxu0 0
    %259 = vmatpush1.bf16.msra.mxu0 %v237
    %260 = vmatprep.subr.bf16.mxu0 0
    %261 = vmatpush1.bf16.msra.mxu0 %v238
    %262 = vmatprep.subr.bf16.mxu0 0
    %263 = vmatpush1.bf16.msra.mxu0 %v239
    %264 = vmatprep.subr.bf16.mxu0 0
    %265 = vmatpush1.bf16.msra.mxu0 0
    %266 = vmatprep.subr.bf16.mxu0 0
    %267 = vmatpush1.bf16.msra.mxu0 0
    %268 = vmatprep.subr.bf16.mxu0 0
    %269 = vmatpush1.bf16.msra.mxu0 0
    %270 = vmatprep.subr.bf16.mxu0 0
    %271 = vmatpush1.bf16.msra.mxu0 0
    %272 = vmatprep.subr.bf16.mxu0 0
    %273 = vmatpush1.bf16.msra.mxu0 0
    %274 = vmatprep.subr.bf16.mxu0 0
    %275 = vmatpush1.bf16.msra.mxu0 0
    %276 = vmatprep.subr.bf16.mxu0 0
    %277 = vmatpush1.bf16.msra.mxu0 0
    %278 = vmatprep.subr.bf16.mxu0 0
    %279 = vmatpush1.bf16.msra.mxu0 0
    %280 = vmatprep.mubr.bf16.mxu0 0
    %281 = vmatmul.mubr.bf16.gmra.mrb[0].mxu0 %v174
    %v282 = vpop.f32.mrb[0].mxu0
    %v283 = vadd.f32 %v198, %v282
    %v284 = vpop.f32.mrb[0].mxu0
    %v285 = vpop.f32.mrb[0].mxu0
    %v286 = vpop.f32.mrb[0].mxu0
    %287 = vdwg.mxu0
    %s288 = sld [smem:[#allocation8 + $0x1]]
    %v289 = vstv %s288
    %v290 = vmul.f32 %v289, %v283
    %v291 = vmax.f32 %v283, %v290
    %v292 = vpack.c.bf16 %v291, %v291
    %s293 = scalar_lea.vmem [#allocation6], 128
    %v294 = vld [vmem:[%s293] sm:$0xf]
    %v295 = vld [vmem:[%s293 + $0x4] sm:$0xf]
    %v296 = vld [vmem:[%s293 + $0x8] sm:$0xf]
    %v297 = vld [vmem:[%s293 + $0xc] sm:$0xf]
    %v298 = vld [vmem:[%s293 + $0x10] sm:$0xf]
    %v299 = vld [vmem:[%s293 + $0x14] sm:$0xf]
    %v300 = vld [vmem:[%s293 + $0x18] sm:$0xf]
    %v301 = vld [vmem:[%s293 + $0x1c] sm:$0xf]
    %v302 = vld [vmem:[%s293 + $0x20] sm:$0xf]
    %v303 = vld [vmem:[%s293 + $0x24] sm:$0xf]
    %v304 = vld [vmem:[%s293 + $0x28] sm:$0xf]
    %v305 = vld [vmem:[%s293 + $0x2c] sm:$0xf]
    %v306 = vld [vmem:[%s293 + $0x30] sm:$0xf]
    %v307 = vld [vmem:[%s293 + $0x34] sm:$0xf]
    %v308 = vld [vmem:[%s293 + $0x38] sm:$0xf]
    %v309 = vld [vmem:[%s293 + $0x3c] sm:$0xf]
    %s310 = scalar_lea.vmem %s2, 2
    %v311 = vld [vmem:[%s310] sm:$0x1]
    %v313 = vlaneseq
    %v314 = vshrl.u32 %v313, 7
    %v315 = vsub.s32 0, %v314
    %v316 = vrot.slane %v311, %v315
    %v334 = vunpack.c.l.b16 %v294
    %v335 = vunpack.c.l.b16 %v295
    %v336 = vunpack.c.l.b16 %v296
    %v337 = vunpack.c.l.b16 %v297
    %v338 = vunpack.c.l.b16 %v298
    %v339 = vunpack.c.l.b16 %v299
    %v340 = vunpack.c.l.b16 %v300
    %v341 = vunpack.c.l.b16 %v301
    %v342 = vunpack.c.l.b16 %v302
    %v343 = vunpack.c.l.b16 %v303
    %v344 = vunpack.c.l.b16 %v304
    %v345 = vunpack.c.l.b16 %v305
    %v346 = vunpack.c.l.b16 %v306
    %v347 = vunpack.c.l.b16 %v307
    %v348 = vunpack.c.l.b16 %v308
    %v349 = vunpack.c.l.b16 %v309
    %v350 = vpack.c.b16 %v335, %v334
    %v351 = vpack.c.b16 %v337, %v336
    %v352 = vpack.c.b16 %v339, %v338
    %v353 = vpack.c.b16 %v341, %v340
    %v354 = vpack.c.b16 %v343, %v342
    %v355 = vpack.c.b16 %v345, %v344
    %v356 = vpack.c.b16 %v347, %v346
    %v357 = vpack.c.b16 %v349, %v348
    %366 = vmatprep.subr.bf16.mxu0 0
    %367 = vmatpush1.bf16.msra.mxu0 %v350
    %368 = vmatprep.subr.bf16.mxu0 0
    %369 = vmatpush1.bf16.msra.mxu0 %v351
    %370 = vmatprep.subr.bf16.mxu0 0
    %371 = vmatpush1.bf16.msra.mxu0 %v352
    %372 = vmatprep.subr.bf16.mxu0 0
    %373 = vmatpush1.bf16.msra.mxu0 %v353
    %374 = vmatprep.subr.bf16.mxu0 0
    %375 = vmatpush1.bf16.msra.mxu0 %v354
    %376 = vmatprep.subr.bf16.mxu0 0
    %377 = vmatpush1.bf16.msra.mxu0 %v355
    %378 = vmatprep.subr.bf16.mxu0 0
    %379 = vmatpush1.bf16.msra.mxu0 %v356
    %380 = vmatprep.subr.bf16.mxu0 0
    %381 = vmatpush1.bf16.msra.mxu0 %v357
    %382 = vmatprep.subr.bf16.mxu0 0
    %383 = vmatpush1.bf16.msra.mxu0 0
    %384 = vmatprep.subr.bf16.mxu0 0
    %385 = vmatpush1.bf16.msra.mxu0 0
    %386 = vmatprep.subr.bf16.mxu0 0
    %387 = vmatpush1.bf16.msra.mxu0 0
    %388 = vmatprep.subr.bf16.mxu0 0
    %389 = vmatpush1.bf16.msra.mxu0 0
    %390 = vmatprep.subr.bf16.mxu0 0
    %391 = vmatpush1.bf16.msra.mxu0 0
    %392 = vmatprep.subr.bf16.mxu0 0
    %393 = vmatpush1.bf16.msra.mxu0 0
    %394 = vmatprep.subr.bf16.mxu0 0
    %395 = vmatpush1.bf16.msra.mxu0 0
    %396 = vmatprep.subr.bf16.mxu0 0
    %397 = vmatpush1.bf16.msra.mxu0 0
    %398 = vmatprep.mubr.bf16.mxu0 0
    %399 = vmatmul.mubr.bf16.gmra.mrb[0].mxu0 %v292
    %v400 = vpop.f32.mrb[0].mxu0
    %v401 = vadd.f32 %v316, %v400
    %v402 = vpop.f32.mrb[0].mxu0
    %v403 = vpop.f32.mrb[0].mxu0
    %v404 = vpop.f32.mrb[0].mxu0
    %405 = vdwg.mxu0
    %s406 = sld [smem:[#allocation8 + $0x2]]
    %v407 = vstv %s406
    %v408 = vmul.f32 %v407, %v401
    %v409 = vmax.f32 %v401, %v408
    %v410 = vpack.c.bf16 %v409, %v409
    %s411 = scalar_lea.vmem [#allocation6], 192
    %v412 = vld [vmem:[%s411] sm:$0xf]
    %v413 = vld [vmem:[%s411 + $0x4] sm:$0xf]
    %v414 = vld [vmem:[%s411 + $0x8] sm:$0xf]
    %v415 = vld [vmem:[%s411 + $0xc] sm:$0xf]
    %v416 = vld [vmem:[%s411 + $0x10] sm:$0xf]
    %v417 = vld [vmem:[%s411 + $0x14] sm:$0xf]
    %v418 = vld [vmem:[%s411 + $0x18] sm:$0xf]
    %v419 = vld [vmem:[%s411 + $0x1c] sm:$0xf]
    %v420 = vld [vmem:[%s411 + $0x20] sm:$0xf]
    %v421 = vld [vmem:[%s411 + $0x24] sm:$0xf]
    %v422 = vld [vmem:[%s411 + $0x28] sm:$0xf]
    %v423 = vld [vmem:[%s411 + $0x2c] sm:$0xf]
    %v424 = vld [vmem:[%s411 + $0x30] sm:$0xf]
    %v425 = vld [vmem:[%s411 + $0x34] sm:$0xf]
    %v426 = vld [vmem:[%s411 + $0x38] sm:$0xf]
    %v427 = vld [vmem:[%s411 + $0x3c] sm:$0xf]
    %s428 = scalar_lea.vmem %s2, 3
    %v429 = vld [vmem:[%s428] sm:$0x1]
    %v431 = vlaneseq
    %v432 = vshrl.u32 %v431, 7
    %v433 = vsub.s32 0, %v432
    %v434 = vrot.slane %v429, %v433
    %v452 = vunpack.c.l.b16 %v412
    %v453 = vunpack.c.l.b16 %v413
    %v454 = vunpack.c.l.b16 %v414
    %v455 = vunpack.c.l.b16 %v415
    %v456 = vunpack.c.l.b16 %v416
    %v457 = vunpack.c.l.b16 %v417
    %v458 = vunpack.c.l.b16 %v418
    %v459 = vunpack.c.l.b16 %v419
    %v460 = vunpack.c.l.b16 %v420
    %v461 = vunpack.c.l.b16 %v421
    %v462 = vunpack.c.l.b16 %v422
    %v463 = vunpack.c.l.b16 %v423
    %v464 = vunpack.c.l.b16 %v424
    %v465 = vunpack.c.l.b16 %v425
    %v466 = vunpack.c.l.b16 %v426
    %v467 = vunpack.c.l.b16 %v427
    %v468 = vpack.c.b16 %v453, %v452
    %v469 = vpack.c.b16 %v455, %v454
    %v470 = vpack.c.b16 %v457, %v456
    %v471 = vpack.c.b16 %v459, %v458
    %v472 = vpack.c.b16 %v461, %v460
    %v473 = vpack.c.b16 %v463, %v462
    %v474 = vpack.c.b16 %v465, %v464
    %v475 = vpack.c.b16 %v467, %v466
    %484 = vmatprep.subr.bf16.mxu0 0
    %485 = vmatpush1.bf16.msra.mxu0 %v468
    %486 = vmatprep.subr.bf16.mxu0 0
    %487 = vmatpush1.bf16.msra.mxu0 %v469
    %488 = vmatprep.subr.bf16.mxu0 0
    %489 = vmatpush1.bf16.msra.mxu0 %v470
    %490 = vmatprep.subr.bf16.mxu0 0
    %491 = vmatpush1.bf16.msra.mxu0 %v471
    %492 = vmatprep.subr.bf16.mxu0 0
    %493 = vmatpush1.bf16.msra.mxu0 %v472
    %494 = vmatprep.subr.bf16.mxu0 0
    %495 = vmatpush1.bf16.msra.mxu0 %v473
    %496 = vmatprep.subr.bf16.mxu0 0
    %497 = vmatpush1.bf16.msra.mxu0 %v474
    %498 = vmatprep.subr.bf16.mxu0 0
    %499 = vmatpush1.bf16.msra.mxu0 %v475
    %500 = vmatprep.subr.bf16.mxu0 0
    %501 = vmatpush1.bf16.msra.mxu0 0
    %502 = vmatprep.subr.bf16.mxu0 0
    %503 = vmatpush1.bf16.msra.mxu0 0
    %504 = vmatprep.subr.bf16.mxu0 0
    %505 = vmatpush1.bf16.msra.mxu0 0
    %506 = vmatprep.subr.bf16.mxu0 0
    %507 = vmatpush1.bf16.msra.mxu0 0
    %508 = vmatprep.subr.bf16.mxu0 0
    %509 = vmatpush1.bf16.msra.mxu0 0
    %510 = vmatprep.subr.bf16.mxu0 0
    %511 = vmatpush1.bf16.msra.mxu0 0
    %512 = vmatprep.subr.bf16.mxu0 0
    %513 = vmatpush1.bf16.msra.mxu0 0
    %514 = vmatprep.subr.bf16.mxu0 0
    %515 = vmatpush1.bf16.msra.mxu0 0
    %516 = vmatprep.mubr.bf16.mxu0 0
    %517 = vmatmul.mubr.bf16.gmra.mrb[0].mxu0 %v410
    %v518 = vpop.f32.mrb[0].mxu0
    %v519 = vadd.f32 %v434, %v518
    %v520 = vpop.f32.mrb[0].mxu0
    %v521 = vpop.f32.mrb[0].mxu0
    %v522 = vpop.f32.mrb[0].mxu0
    %523 = vdwg.mxu0
    %s524 = sld [smem:[#allocation8 + $0x3]]
    %v525 = vstv %s524
    %v526 = vmul.f32 %v525, %v519
    %v527 = vmax.f32 %v519, %v526
    %v528 = vpack.c.bf16 %v527, %v527
    %s529 = scalar_lea.vmem [#allocation6], 256
    %v530 = vld [vmem:[%s529] sm:$0xf]
    %v531 = vld [vmem:[%s529 + $0x4] sm:$0xf]
    %v532 = vld [vmem:[%s529 + $0x8] sm:$0xf]
    %v533 = vld [vmem:[%s529 + $0xc] sm:$0xf]
    %v534 = vld [vmem:[%s529 + $0x10] sm:$0xf]
    %v535 = vld [vmem:[%s529 + $0x14] sm:$0xf]
    %v536 = vld [vmem:[%s529 + $0x18] sm:$0xf]
    %v537 = vld [vmem:[%s529 + $0x1c] sm:$0xf]
    %v538 = vld [vmem:[%s529 + $0x20] sm:$0xf]
    %v539 = vld [vmem:[%s529 + $0x24] sm:$0xf]
    %v540 = vld [vmem:[%s529 + $0x28] sm:$0xf]
    %v541 = vld [vmem:[%s529 + $0x2c] sm:$0xf]
    %v542 = vld [vmem:[%s529 + $0x30] sm:$0xf]
    %v543 = vld [vmem:[%s529 + $0x34] sm:$0xf]
    %v544 = vld [vmem:[%s529 + $0x38] sm:$0xf]
    %v545 = vld [vmem:[%s529 + $0x3c] sm:$0xf]
    %s546 = scalar_lea.vmem %s2, 4
    %v547 = vld [vmem:[%s546] sm:$0x1]
    %v549 = vlaneseq
    %v550 = vshrl.u32 %v549, 7
    %v551 = vsub.s32 0, %v550
    %v552 = vrot.slane %v547, %v551
    %v570 = vunpack.c.l.b16 %v530
    %v571 = vunpack.c.l.b16 %v531
    %v572 = vunpack.c.l.b16 %v532
    %v573 = vunpack.c.l.b16 %v533
    %v574 = vunpack.c.l.b16 %v534
    %v575 = vunpack.c.l.b16 %v535
    %v576 = vunpack.c.l.b16 %v536
    %v577 = vunpack.c.l.b16 %v537
    %v578 = vunpack.c.l.b16 %v538
    %v579 = vunpack.c.l.b16 %v539
    %v580 = vunpack.c.l.b16 %v540
    %v581 = vunpack.c.l.b16 %v541
    %v582 = vunpack.c.l.b16 %v542
    %v583 = vunpack.c.l.b16 %v543
    %v584 = vunpack.c.l.b16 %v544
    %v585 = vunpack.c.l.b16 %v545
    %v586 = vpack.c.b16 %v571, %v570
    %v587 = vpack.c.b16 %v573, %v572
    %v588 = vpack.c.b16 %v575, %v574
    %v589 = vpack.c.b16 %v577, %v576
    %v590 = vpack.c.b16 %v579, %v578
    %v591 = vpack.c.b16 %v581, %v580
    %v592 = vpack.c.b16 %v583, %v582
    %v593 = vpack.c.b16 %v585, %v584
    %602 = vmatprep.subr.bf16.mxu0 0
    %603 = vmatpush1.bf16.msra.mxu0 %v586
    %604 = vmatprep.subr.bf16.mxu0 0
    %605 = vmatpush1.bf16.msra.mxu0 %v587
    %606 = vmatprep.subr.bf16.mxu0 0
    %607 = vmatpush1.bf16.msra.mxu0 %v588
    %608 = vmatprep.subr.bf16.mxu0 0
    %609 = vmatpush1.bf16.msra.mxu0 %v589
    %610 = vmatprep.subr.bf16.mxu0 0
    %611 = vmatpush1.bf16.msra.mxu0 %v590
    %612 = vmatprep.subr.bf16.mxu0 0
    %613 = vmatpush1.bf16.msra.mxu0 %v591
    %614 = vmatprep.subr.bf16.mxu0 0
    %615 = vmatpush1.bf16.msra.mxu0 %v592
    %616 = vmatprep.subr.bf16.mxu0 0
    %617 = vmatpush1.bf16.msra.mxu0 %v593
    %618 = vmatprep.subr.bf16.mxu0 0
    %619 = vmatpush1.bf16.msra.mxu0 0
    %620 = vmatprep.subr.bf16.mxu0 0
    %621 = vmatpush1.bf16.msra.mxu0 0
    %622 = vmatprep.subr.bf16.mxu0 0
    %623 = vmatpush1.bf16.msra.mxu0 0
    %624 = vmatprep.subr.bf16.mxu0 0
    %625 = vmatpush1.bf16.msra.mxu0 0
    %626 = vmatprep.subr.bf16.mxu0 0
    %627 = vmatpush1.bf16.msra.mxu0 0
    %628 = vmatprep.subr.bf16.mxu0 0
    %629 = vmatpush1.bf16.msra.mxu0 0
    %630 = vmatprep.subr.bf16.mxu0 0
    %631 = vmatpush1.bf16.msra.mxu0 0
    %632 = vmatprep.subr.bf16.mxu0 0
    %633 = vmatpush1.bf16.msra.mxu0 0
    %634 = vmatprep.mubr.bf16.mxu0 0
    %635 = vmatmul.mubr.bf16.gmra.mrb[0].mxu0 %v528
    %v636 = vpop.f32.mrb[0].mxu0
    %v637 = vadd.f32 %v552, %v636
    %v638 = vpop.f32.mrb[0].mxu0
    %v639 = vpop.f32.mrb[0].mxu0
    %v640 = vpop.f32.mrb[0].mxu0
    %641 = vdwg.mxu0
    %642 = vst [vmem:[#allocation9] sm:$0xff] %v637
    // Predicated region
    $region30: #{tpu_custom_call.1} parent=1 // pred_check
      _
    $region31: #{tpu_custom_call.1} parent=1 // pred_check_branch
      %644 = sbr.rel (0) target = $region33
    $region32: #{tpu_custom_call.1} parent=1 // pred_region
      %s646 = ssub.s32 128, 128
      %647 = vsyncadd [#allocation4], %s646
      %s649 = sshll.u32 [#allocation9], 4
      %s650 = int_to_ptr.vmem [resolvable:$true] %s649
      %652 = dma.vmem_to_hbm [thread:$0]  %s650, 128, %s4, [#allocation4]
    $region33: #{tpu_custom_call.1} parent=1 // pred_fallthru
      _
    // Predicated region
    $region34: #{tpu_custom_call.1} parent=1 // pred_check
      _
    $region35: #{tpu_custom_call.1} parent=1 // pred_check_branch
      %654 = sbr.rel (0) target = $region37
    $region36: #{tpu_custom_call.1} parent=1 // pred_region
      %655 = dma.done [#allocation4], 128
    $region37: #{tpu_custom_call.1} parent=1 // pred_fallthru
      _
    %656 = vsyncpa [#allocation3], 1
    %657 = vsyncpa [#allocation7], 1
    %658 = vsyncpa [#allocation4], 1
    %659 = vsyncpa [#allocation5], 1

</llo_original>
